<compile_context>
chip_gen: v5e
topology: v5e:2x2
jax: 0.10.0
libtpu: 0.0.40
codegen_flags: <defaults>
</compile_context>

<pallas_src>
import functools
from typing import NamedTuple, Optional

import jax
import jax.numpy as jnp
from jax.experimental import pallas as pl
from jax.experimental.pallas import tpu as pltpu


def _round_up(v, m):
    return ((v + m - 1) // m) * m


def _sublane_multiple(dtype):
    itemsize = jnp.dtype(dtype).itemsize
    if itemsize >= 4:
        return 8
    if itemsize == 2:
        return 16
    return 32


def _pick_tile(dim, max_tile, align):
    """Largest tile (multiple of `align`, <= max_tile) minimizing padding waste."""
    dim = max(int(dim), 1)
    max_tile = max(_round_up(int(max_tile), align), align)
    best_t, best_key = align, None
    t = align
    while t <= max_tile:
        waste = _round_up(dim, t) - dim
        key = (waste, -t)          # minimal waste, tie-break larger tile
        if best_key is None or key < best_key:
            best_key, best_t = key, t
        t += align
    return best_t


@functools.lru_cache(maxsize=1)
def _device_profile():
    """Generation-aware tile caps.

    v7x: 64 MiB VMEM per TensorCore and 2 TCs/chip -> smaller tk cap and a
    ">=2 parallel blocks" requirement.  v5e/v6e: 128 MiB VMEM, 1 TC -> bigger
    tk to amortize per-grid-step overhead and cut weight re-reads.
    """
    vmem = 128 << 20
    try:
        vmem = int(pltpu.get_tpu_info().vmem_capacity_bytes)
    except Exception:
        pass
    two_tc = vmem <= (96 << 20)    # v7x-like (64 MiB per TC)
    if two_tc:
        return {"tm": 512, "tn": 512, "tk": 512, "two_tc": True}
    return {"tm": 512, "tn": 512, "tk": 1024, "two_tc": False}


# ---------------------------------------------------------------------------
# Kernels
# ---------------------------------------------------------------------------

# Single K-step fast path: no accumulator scratch, no zero-init pass.
def _mm_k1_kernel(x_ref, w_ref, o_ref):
    o_ref[...] = jnp.dot(x_ref[...].astype(w_ref.dtype), w_ref[...],
                         preferred_element_type=jnp.float32).astype(o_ref.dtype)


def _mm_k1_bias_kernel(x_ref, w_ref, b_ref, o_ref):
    acc = jnp.dot(x_ref[...].astype(w_ref.dtype), w_ref[...],
                  preferred_element_type=jnp.float32)
    o_ref[...] = (acc + b_ref[...]).astype(o_ref.dtype)


# Multi K-step, f32 output: accumulate directly into the resident output tile
# (output block index is independent of k, so it stays in VMEM across k).
def _mm_inplace_kernel(x_ref, w_ref, o_ref):
    @pl.when(pl.program_id(2) == 0)
    def _():
        o_ref[...] = jnp.zeros_like(o_ref)

    o_ref[...] += jnp.dot(x_ref[...].astype(w_ref.dtype), w_ref[...],
                          preferred_element_type=jnp.float32)


def _mm_inplace_bias_kernel(x_ref, w_ref, b_ref, o_ref):
    @pl.when(pl.program_id(2) == 0)
    def _():
        o_ref[...] = jnp.zeros_like(o_ref)

    o_ref[...] += jnp.dot(x_ref[...].astype(w_ref.dtype), w_ref[...],
                          preferred_element_type=jnp.float32)

    @pl.when(pl.program_id(2) == pl.num_programs(2) - 1)
    def _():
        o_ref[...] += b_ref[...]


# Multi K-step, non-f32 output: classic f32 VMEM scratch accumulator.
def _mm_acc_kernel(x_ref, w_ref, o_ref, acc_ref):
    @pl.when(pl.program_id(2) == 0)
    def _():
        acc_ref[...] = jnp.zeros_like(acc_ref)

    acc_ref[...] += jnp.dot(x_ref[...].astype(w_ref.dtype), w_ref[...],
                            preferred_element_type=jnp.float32)

    @pl.when(pl.program_id(2) == pl.num_programs(2) - 1)
    def _():
        o_ref[...] = acc_ref[...].astype(o_ref.dtype)


def _mm_acc_bias_kernel(x_ref, w_ref, b_ref, o_ref, acc_ref):
    @pl.when(pl.program_id(2) == 0)
    def _():
        acc_ref[...] = jnp.zeros_like(acc_ref)

    acc_ref[...] += jnp.dot(x_ref[...].astype(w_ref.dtype), w_ref[...],
                            preferred_element_type=jnp.float32)

    @pl.when(pl.program_id(2) == pl.num_programs(2) - 1)
    def _():
        o_ref[...] = (acc_ref[...] + b_ref[...]).astype(o_ref.dtype)


# ---------------------------------------------------------------------------
# One-time parameter preparation (mirrors _slice_weight / _slice_bias, done
# once outside the per-call hot path; weight pre-transposed, pre-cast, pre-padded).
# ---------------------------------------------------------------------------

class LinearConcatParams(NamedTuple):
    w: jax.Array              # (Kp, Np) pre-transposed, padded weight slice
    b: Optional[jax.Array]    # (1, Np) f32 bias or None
    in_features: int
    out_features: int
    tk: int
    tn: int


def prepare_linear_concat_params(weight, in_features, has_bias=True, *,
                                 compute_dtype=None, tn_max=None, tk_max=None):
    """Split/transpose/pad the concatenated (out, in[+1]) weight once.

    compute_dtype: optionally store the weight in bf16 (x tile is cast
    in-kernel, accumulation stays f32, bias add stays f32).
    """
    prof = _device_profile()
    weight = jnp.asarray(weight)
    N = int(weight.shape[0])
    K = int(in_features)

    w_t = weight[:, :K].T                                  # (K, N)
    if compute_dtype is not None:
        w_t = w_t.astype(compute_dtype)

    bias = None
    if has_bias:
        bias = weight[:, K:K + 1].T.astype(jnp.float32)    # (1, N), f32 epilogue add

    tn = _pick_tile(N, tn_max if tn_max is not None else prof["tn"], 128)
    tk = _pick_tile(K, tk_max if tk_max is not None else prof["tk"], 128)
    Kp, Np = _round_up(K, tk), _round_up(N, tn)

    if (Kp, Np) != (K, N):
        w_t = jnp.pad(w_t, ((0, Kp - K), (0, Np - N)))
        if bias is not None:
            bias = jnp.pad(bias, ((0, 0), (0, Np - N)))

    return LinearConcatParams(w=w_t, b=bias, in_features=K, out_features=N,
                              tk=tk, tn=tn)


# ---------------------------------------------------------------------------
# Forward
# ---------------------------------------------------------------------------

def linear_concat_forward(x, params: LinearConcatParams, *, tm_max=None,
                          use_pallas=None):
    """Forward of LinearConcat: x @ W_slice.T + bias, given prepared params."""
    prof = _device_profile()
    x = jnp.asarray(x)
    M, K = x.shape
    if K != params.in_features:
        raise ValueError("x / weight inner dims mismatch")
    N = params.out_features
    Kp, Np = params.w.shape
    tk, tn = params.tk, params.tn
    out_dtype = x.dtype
    has_bias = params.b is not None

    if use_pallas is None:
        # Tiny problems: per-grid-step + custom-call overhead dominates.
        use_pallas = (M * N * K) >= (128 * 128 * 128)

    if not use_pallas:
        y = jnp.dot(x.astype(params.w.dtype), params.w[:K, :N],
                    preferred_element_type=jnp.float32)
        if has_bias:
            y = y + params.b[:, :N]
        return y.astype(out_dtype)

    sublane = _sublane_multiple(out_dtype)     # out dtype == x dtype
    tm = _pick_tile(M, tm_max if tm_max is not None else prof["tm"], sublane)
    Mp = _round_up(M, tm)

    # v7x (2 TensorCores): make sure the 'parallel' axes expose >=2 blocks so
    # both cores get work; otherwise one TC sits idle (straight 2x loss).
    if prof["two_tc"] and (Mp // tm) * (Np // tn) < 2:
        new_tn = None
        cand = tn - 128
        while cand >= 128:
            if Np % cand == 0:
                new_tn = cand
                break
            cand -= 128
        if new_tn is not None:
            tn = new_tn
        else:
            cand = tm - sublane
            while cand >= sublane:
                if Mp % cand == 0:
                    tm = cand
                    Mp = _round_up(M, tm)
                    break
                cand -= sublane

    # Per-call padding touches only x (the activation); weight/bias were
    # padded once at prepare time.
    x_p = x
    if Mp != M or Kp != K:
        x_p = jnp.pad(x, ((0, Mp - M), (0, Kp - K)))

    nk = Kp // tk
    in_specs = [
        pl.BlockSpec((tm, tk), lambda i, j, k: (i, k)),
        pl.BlockSpec((tk, tn), lambda i, j, k: (k, j)),
    ]
    inputs = [x_p, params.w]
    if has_bias:
        in_specs.append(pl.BlockSpec((1, tn), lambda i, j, k: (0, j)))
        inputs.append(params.b)

    scratch_shapes = []
    if nk == 1:
        kernel = _mm_k1_bias_kernel if has_bias else _mm_k1_kernel
    elif out_dtype == jnp.float32:
        kernel = _mm_inplace_bias_kernel if has_bias else _mm_inplace_kernel
    else:
        kernel = _mm_acc_bias_kernel if has_bias else _mm_acc_kernel
        scratch_shapes = [pltpu.VMEM((tm, tn), jnp.float32)]

    x_item = jnp.dtype(x.dtype).itemsize
    w_item = jnp.dtype(params.w.dtype).itemsize
    o_item = jnp.dtype(out_dtype).itemsize

    # Explicit scoped-VMEM budget: double-buffered x/w/out tiles (+ optional
    # acc / bias) with headroom, capped at 64 MiB (<= physical on all gens).
    vmem_need = (2 * (tm * tk * x_item + tk * tn * w_item)
                 + 2 * tm * tn * o_item
                 + (tm * tn * 4 if scratch_shapes else 0)
                 + (2 * tn * 4 if has_bias else 0))
    vmem_limit = int(min(max(vmem_need * 3 // 2 + (4 << 20), 32 << 20), 64 << 20))

    cost = pl.CostEstimate(
        flops=2 * M * N * K,
        transcendentals=0,
        bytes_accessed=(M * K * x_item + Kp * Np * w_item + M * N * o_item
                        + (Np * 4 if has_bias else 0)),
    )

    # TODO(synk): optionally set pipeline_mode=pl.Buffered(3) on the weight
    # BlockSpec for skinny-batch v5e shapes; keep only if an xprof delta is real.
    y_p = pl.pallas_call(
        kernel,
        out_shape=jax.ShapeDtypeStruct((Mp, Np), out_dtype),
        grid_spec=pltpu.PrefetchScalarGridSpec(
            num_scalar_prefetch=0,
            grid=(Mp // tm, Np // tn, nk),
            in_specs=in_specs,
            out_specs=pl.BlockSpec((tm, tn), lambda i, j, k: (i, j)),
            scratch_shapes=scratch_shapes,
        ),
        compiler_params=pltpu.CompilerParams(
            dimension_semantics=("parallel", "parallel", "arbitrary"),
            vmem_limit_bytes=vmem_limit),
        cost_estimate=cost,
    )(*inputs)

    if Mp == M and Np == N:
        return y_p
    return y_p[:M, :N]


# ---------------------------------------------------------------------------
# Self-test
# ---------------------------------------------------------------------------

if __name__ == "__main__":
    key = jax.random.PRNGKey(0)
    kx, kw = jax.random.split(key)

    batch, in_features, out_features = 192, 384, 256

    bound = 1.0 / (in_features ** 0.5)
    # Concatenated parameter as in LinearConcat.__init__ (weight || bias, dim=1).
    weight = jax.random.uniform(
        kw, (out_features, in_features + 1), dtype=jnp.float32,
        minval=-bound, maxval=bound)
    x = jax.random.normal(kx, (batch, in_features), dtype=jnp.float32)

    y_ref = x @ weight[:, :in_features].T + weight[:, in_features]
    y_nb_ref = x @ weight[:, :in_features].T

    # 1) Default generation-aware tiles, bias=True (single-K fast path).
    params = prepare_linear_concat_params(weight, in_features, has_bias=True)
    y = jax.block_until_ready(linear_concat_forward(x, params, use_pallas=True))
    assert y.shape == (batch, out_features)
    assert jnp.allclose(y, y_ref, atol=1e-4, rtol=1e-4)

    # 2) Small tiles forcing a (3, 2, 3) grid with K-accumulation (in-place f32 acc).
    params_small = prepare_linear_concat_params(
        weight, in_features, has_bias=True, tn_max=128, tk_max=128)
    y2 = jax.block_until_ready(
        linear_concat_forward(x, params_small, tm_max=64, use_pallas=True))
    assert jnp.allclose(y2, y_ref, atol=1e-4, rtol=1e-4)

    # 3) bias=False path (no dummy zero-bias DMA / add).
    params_nb = prepare_linear_concat_params(
        weight[:, :in_features], in_features, has_bias=False)
    y3 = jax.block_until_ready(
        linear_concat_forward(x, params_nb, use_pallas=True))
    assert jnp.allclose(y3, y_nb_ref, atol=1e-4, rtol=1e-4)

    # 4) bf16 compute path (weight stored bf16, f32 accumulation + f32 bias add).
    params_bf16 = prepare_linear_concat_params(
        weight, in_features, has_bias=True, compute_dtype=jnp.bfloat16)
    y4 = jax.block_until_ready(
        linear_concat_forward(x, params_bf16, use_pallas=True))
    assert jnp.allclose(y4, y_ref, atol=5e-2, rtol=5e-2)

    print("KERNEL_OK")
</pallas_src>

<mosaic_0001>
module attributes {stable_mosaic.version = 11 : i64} {
  func.func @_mm_k1_bias_kernel(%arg0: i32, %arg1: i32, %arg2: i32, %arg3: memref<192x384xf32, #tpu.memory_space<vmem>>, %arg4: memref<384x256xf32, #tpu.memory_space<vmem>>, %arg5: memref<1x256xf32, #tpu.memory_space<vmem>>, %arg6: memref<192x256xf32, #tpu.memory_space<vmem>>) attributes {dimension_semantics = [#tpu.dimension_semantics<parallel>, #tpu.dimension_semantics<parallel>, #tpu.dimension_semantics<arbitrary>], iteration_bounds = array<i64: 1, 1, 1>, scalar_prefetch = 0 : i64, scratch_operands = 0 : i64, tpu.core_type = #tpu.core_type<tc>, window_params = [{transform_indices = @transform_0, window_bounds = array<i64: 192, 384>}, {transform_indices = @transform_1, window_bounds = array<i64: 384, 256>}, {transform_indices = @transform_2, window_bounds = array<i64: 1, 256>}, {transform_indices = @transform_3, window_bounds = array<i64: 192, 256>}]} {
    %c0 = arith.constant 0 : index
    %c0_0 = arith.constant 0 : index
    %0 = vector.load %arg3[%c0, %c0_0] : memref<192x384xf32, #tpu.memory_space<vmem>>, vector<192x384xf32>
    %c0_1 = arith.constant 0 : index
    %c0_2 = arith.constant 0 : index
    %1 = vector.load %arg4[%c0_1, %c0_2] : memref<384x256xf32, #tpu.memory_space<vmem>>, vector<384x256xf32>
    %cst = arith.constant dense<0.000000e+00> : vector<192x256xf32>
    %2 = tpu.matmul %0, %1, %cst {dimension_numbers = #tpu.dot_dimension_numbers<[1], [0], [0], [1], [0, 0, 1, 1], [], []>} : vector<192x384xf32>, vector<384x256xf32>, vector<192x256xf32> -> vector<192x256xf32>
    %c0_3 = arith.constant 0 : index
    %c0_4 = arith.constant 0 : index
    %3 = vector.load %arg5[%c0_3, %c0_4] : memref<1x256xf32, #tpu.memory_space<vmem>>, vector<1x256xf32>
    %4 = vector.broadcast %3 : vector<1x256xf32> to vector<192x256xf32>
    %5 = arith.addf %2, %4 : vector<192x256xf32>
    %c0_5 = arith.constant 0 : index
    %c0_6 = arith.constant 0 : index
    %6 = vector.load %arg6[%c0_5, %c0_6] : memref<192x256xf32, #tpu.memory_space<vmem>>, vector<192x256xf32>
    tpu.vector_store %arg6[%c0_5, %c0_6], %5 {strides = array<i32>} : memref<192x256xf32, #tpu.memory_space<vmem>>, vector<192x256xf32>,
    return
  }
  func.func @transform_0(%arg0: i32, %arg1: i32, %arg2: i32) -> (i32, i32) {
    %c0_i32 = arith.constant 0 : i32
    return %arg0, %arg2 : i32, i32
  }
  func.func @transform_1(%arg0: i32, %arg1: i32, %arg2: i32) -> (i32, i32) {
    %c0_i32 = arith.constant 0 : i32
    return %arg2, %arg1 : i32, i32
  }
  func.func @transform_2(%arg0: i32, %arg1: i32, %arg2: i32) -> (i32, i32) {
    %c0_i32 = arith.constant 0 : i32
    %c0_i32_0 = arith.constant 0 : i32
    return %c0_i32, %arg1 : i32, i32
  }
  func.func @transform_3(%arg0: i32, %arg1: i32, %arg2: i32) -> (i32, i32) {
    %c0_i32 = arith.constant 0 : i32
    return %arg0, %arg1 : i32, i32
  }
}

</mosaic_0001>

<llo_original>
// kernel: tpu_custom_call.1
$region0: #{tpu_custom_call.1}
  #allocation0 [shape = 'u32[]', space=smem, size = 0x4, offset = 0x4, fixed_abs, tag = 'smem constant byte address 0x4 - core index']
  #allocation1 [shape = 'u32[72,128]{1,0:T(1,128)}', space=vmem, size = 0x9000, scoped, tag = 'internal scratch']
  %s0 = inlined_call_operand.hbm [shape: f32[192,384], index: 0, kind: input, shape index: {}]
  %s1 = inlined_call_operand.hbm [shape: f32[384,256], index: 1, kind: input, shape index: {}]
  %s2 = inlined_call_operand.hbm [shape: f32[1,256], index: 2, kind: input, shape index: {}]
  %s3 = inlined_call_operand.hbm [shape: f32[192,256], index: 3, kind: output, shape index: {}]
  %s4 = sld [smem:[#allocation0]]
  $region34: #{tpu_custom_call.1} parent=0
    _
  %s6 = ssub.s32 1, %s4
  %s7 = scalar_select 0, %s6, %s4
  $region1: #{tpu_custom_call.1} parent=0
    #allocation2 [shape = 'u8[294912]{0}', space=vmem, size = 0x48000, scoped, tag = 'input window, operand 0, single buffered']
    #allocation3 [shape = 's32[1]{0}', space=sflag, size = 0x4, scoped, tag = 'scoped memory for tpu_custom_call.1']
    #allocation4 [shape = 's32[1]{0}', space=sflag, size = 0x4, scoped, tag = 'scoped memory for tpu_custom_call.1']
    #allocation5 [shape = 'u8[393216]{0}', space=vmem, size = 0x60000, scoped, tag = 'input window, operand 1, single buffered']
    #allocation6 [shape = 's32[1]{0}', space=sflag, size = 0x4, scoped, tag = 'scoped memory for tpu_custom_call.1']
    #allocation7 [shape = 'u8[1024]{0}', space=vmem, size = 0x400, scoped, tag = 'input window, operand 2, single buffered']
    #allocation8 [shape = 'u8[196608]{0}', space=vmem, size = 0x30000, scoped, tag = 'output window, operand 0, single buffered']
    %8 = vsyncpa [#allocation3], 0
    %9 = vsyncpa [#allocation6], 0
    %10 = vsyncpa [#allocation4], 0
    // Predicated region
    $region2: #{tpu_custom_call.1} parent=1 // pred_check
      _
    $region3: #{tpu_custom_call.1} parent=1 // pred_check_branch
      %12 = sbr.rel (0) target = $region5
    $region4: #{tpu_custom_call.1} parent=1 // pred_region
      %14 = vsyncadd [#allocation3], 0
      %s15 = sshll.u32 %s0, 4
      %s16 = int_to_ptr.hbm [resolvable:$true] %s15
      %s17 = sshll.u32 [#allocation2], 4
      %s18 = int_to_ptr.vmem [resolvable:$true] %s17
      %23 = dma.hbm_to_vmem [thread:$0]  %s16, 9216, %s18, [#allocation3], 384, 384, 24
    $region5: #{tpu_custom_call.1} parent=1 // pred_fallthru
      _
    // Predicated region
    $region6: #{tpu_custom_call.1} parent=1 // pred_check
      _
    $region7: #{tpu_custom_call.1} parent=1 // pred_check_branch
      %25 = sbr.rel (0) target = $region9
    $region8: #{tpu_custom_call.1} parent=1 // pred_region
      %27 = vsyncadd [#allocation6], 0
      %s28 = sshll.u32 %s1, 4
      %s29 = int_to_ptr.hbm [resolvable:$true] %s28
      %s30 = sshll.u32 [#allocation5], 4
      %s31 = int_to_ptr.vmem [resolvable:$true] %s30
      %36 = dma.hbm_to_vmem [thread:$0]  %s29, 12288, %s31, [#allocation6], 256, 256, 16
    $region9: #{tpu_custom_call.1} parent=1 // pred_fallthru
      _
    // Predicated region
    $region10: #{tpu_custom_call.1} parent=1 // pred_check
      _
    $region11: #{tpu_custom_call.1} parent=1 // pred_check_branch
      %38 = sbr.rel (0) target = $region13
    $region12: #{tpu_custom_call.1} parent=1 // pred_region
      %40 = vsyncadd [#allocation6], 0
      %s42 = sshll.u32 %s2, 4
      %s43 = int_to_ptr.hbm [resolvable:$true] %s42
      %s44 = sshll.u32 [#allocation7], 4
      %s45 = int_to_ptr.vmem [resolvable:$true] %s44
      %47 = dma.hbm_to_vmem [thread:$0]  %s43, 32, %s45, [#allocation6]
    $region13: #{tpu_custom_call.1} parent=1 // pred_fallthru
      _
    // Predicated region
    $region14: #{tpu_custom_call.1} parent=1 // pred_check
      _
    $region15: #{tpu_custom_call.1} parent=1 // pred_check_branch
      %49 = sbr.rel (0) target = $region17
    $region16: #{tpu_custom_call.1} parent=1 // pred_region
      %51 = dma.done [#allocation3], 9216
    $region17: #{tpu_custom_call.1} parent=1 // pred_fallthru
      _
    // Predicated region
    $region18: #{tpu_custom_call.1} parent=1 // pred_check
      _
    $region19: #{tpu_custom_call.1} parent=1 // pred_check_branch
      %53 = sbr.rel (0) target = $region21
    $region20: #{tpu_custom_call.1} parent=1 // pred_region
      %55 = dma.done [#allocation6], 12288
    $region21: #{tpu_custom_call.1} parent=1 // pred_fallthru
      _
    // Predicated region
    $region22: #{tpu_custom_call.1} parent=1 // pred_check
      _
    $region23: #{tpu_custom_call.1} parent=1 // pred_check_branch
      %57 = sbr.rel (0) target = $region25
    $region24: #{tpu_custom_call.1} parent=1 // pred_region
      %59 = dma.done [#allocation6], 32
    $region25: #{tpu_custom_call.1} parent=1 // pred_fallthru
      _
    %v60 = vld [vmem:[#allocation2] sm:$0xff]
    %v61 = vld [vmem:[#allocation2 + $0x8] sm:$0xff]
    %v62 = vld [vmem:[#allocation2 + $0x10] sm:$0xff]
    %v63 = vld [vmem:[#allocation2 + $0x18] sm:$0xff]
    %v64 = vld [vmem:[#allocation2 + $0x20] sm:$0xff]
    %v65 = vld [vmem:[#allocation2 + $0x28] sm:$0xff]
    %v66 = vld [vmem:[#allocation2 + $0x30] sm:$0xff]
    %v67 = vld [vmem:[#allocation2 + $0x38] sm:$0xff]
    %v68 = vld [vmem:[#allocation2 + $0x40] sm:$0xff]
    %v69 = vld [vmem:[#allocation2 + $0x48] sm:$0xff]
    %v70 = vld [vmem:[#allocation2 + $0x50] sm:$0xff]
    %v71 = vld [vmem:[#allocation2 + $0x58] sm:$0xff]
    %v72 = vld [vmem:[#allocation2 + $0x60] sm:$0xff]
    %v73 = vld [vmem:[#allocation2 + $0x68] sm:$0xff]
    %v74 = vld [vmem:[#allocation2 + $0x70] sm:$0xff]
    %v75 = vld [vmem:[#allocation2 + $0x78] sm:$0xff]
    %v76 = vld [vmem:[#allocation2 + $0x80] sm:$0xff]
    %v77 = vld [vmem:[#allocation2 + $0x88] sm:$0xff]
    %v78 = vld [vmem:[#allocation2 + $0x90] sm:$0xff]
    %v79 = vld [vmem:[#allocation2 + $0x98] sm:$0xff]
    %v80 = vld [vmem:[#allocation2 + $0xa0] sm:$0xff]
    %v81 = vld [vmem:[#allocation2 + $0xa8] sm:$0xff]
    %v82 = vld [vmem:[#allocation2 + $0xb0] sm:$0xff]
    %v83 = vld [vmem:[#allocation2 + $0xb8] sm:$0xff]
    %v84 = vld [vmem:[#allocation2 + $0xc0] sm:$0xff]
    %v85 = vld [vmem:[#allocation2 + $0xc8] sm:$0xff]
    %v86 = vld [vmem:[#allocation2 + $0xd0] sm:$0xff]
    %v87 = vld [vmem:[#allocation2 + $0xd8] sm:$0xff]
    %v88 = vld [vmem:[#allocation2 + $0xe0] sm:$0xff]
    %v89 = vld [vmem:[#allocation2 + $0xe8] sm:$0xff]
    %v90 = vld [vmem:[#allocation2 + $0xf0] sm:$0xff]
    %v91 = vld [vmem:[#allocation2 + $0xf8] sm:$0xff]
    %v92 = vld [vmem:[#allocation2 + $0x100] sm:$0xff]
    %v93 = vld [vmem:[#allocation2 + $0x108] sm:$0xff]
    %v94 = vld [vmem:[#allocation2 + $0x110] sm:$0xff]
    %v95 = vld [vmem:[#allocation2 + $0x118] sm:$0xff]
    %v96 = vld [vmem:[#allocation2 + $0x120] sm:$0xff]
    %v97 = vld [vmem:[#allocation2 + $0x128] sm:$0xff]
    %v98 = vld [vmem:[#allocation2 + $0x130] sm:$0xff]
    %v99 = vld [vmem:[#allocation2 + $0x138] sm:$0xff]
    %v100 = vld [vmem:[#allocation2 + $0x140] sm:$0xff]
    %v101 = vld [vmem:[#allocation2 + $0x148] sm:$0xff]
    %v102 = vld [vmem:[#allocation2 + $0x150] sm:$0xff]
    %v103 = vld [vmem:[#allocation2 + $0x158] sm:$0xff]
    %v104 = vld [vmem:[#allocation2 + $0x160] sm:$0xff]
    %v105 = vld [vmem:[#allocation2 + $0x168] sm:$0xff]
    %v106 = vld [vmem:[#allocation2 + $0x170] sm:$0xff]
    %v107 = vld [vmem:[#allocation2 + $0x178] sm:$0xff]
    %v108 = vld [vmem:[#allocation2 + $0x180] sm:$0xff]
    %v109 = vld [vmem:[#allocation2 + $0x188] sm:$0xff]
    %v110 = vld [vmem:[#allocation2 + $0x190] sm:$0xff]
    %v111 = vld [vmem:[#allocation2 + $0x198] sm:$0xff]
    %v112 = vld [vmem:[#allocation2 + $0x1a0] sm:$0xff]
    %v113 = vld [vmem:[#allocation2 + $0x1a8] sm:$0xff]
    %v114 = vld [vmem:[#allocation2 + $0x1b0] sm:$0xff]
    %v115 = vld [vmem:[#allocation2 + $0x1b8] sm:$0xff]
    %v116 = vld [vmem:[#allocation2 + $0x1c0] sm:$0xff]
    %v117 = vld [vmem:[#allocation2 + $0x1c8] sm:$0xff]
    %v118 = vld [vmem:[#allocation2 + $0x1d0] sm:$0xff]
    %v119 = vld [vmem:[#allocation2 + $0x1d8] sm:$0xff]
    %v120 = vld [vmem:[#allocation2 + $0x1e0] sm:$0xff]
    %v121 = vld [vmem:[#allocation2 + $0x1e8] sm:$0xff]
    %v122 = vld [vmem:[#allocation2 + $0x1f0] sm:$0xff]
    %v123 = vld [vmem:[#allocation2 + $0x1f8] sm:$0xff]
    %v124 = vld [vmem:[#allocation2 + $0x200] sm:$0xff]
    %v125 = vld [vmem:[#allocation2 + $0x208] sm:$0xff]
    %v126 = vld [vmem:[#allocation2 + $0x210] sm:$0xff]
    %v127 = vld [vmem:[#allocation2 + $0x218] sm:$0xff]
    %v128 = vld [vmem:[#allocation2 + $0x220] sm:$0xff]
    %v129 = vld [vmem:[#allocation2 + $0x228] sm:$0xff]
    %v130 = vld [vmem:[#allocation2 + $0x230] sm:$0xff]
    %v131 = vld [vmem:[#allocation2 + $0x238] sm:$0xff]
    %v132 = vld [vmem:[#allocation5] sm:$0xff]
    %v133 = vld [vmem:[#allocation5 + $0x8] sm:$0xff]
    %v134 = vld [vmem:[#allocation5 + $0x10] sm:$0xff]
    %v135 = vld [vmem:[#allocation5 + $0x18] sm:$0xff]
    %v136 = vld [vmem:[#allocation5 + $0x20] sm:$0xff]
    %v137 = vld [vmem:[#allocation5 + $0x28] sm:$0xff]
    %v138 = vld [vmem:[#allocation5 + $0x30] sm:$0xff]
    %v139 = vld [vmem:[#allocation5 + $0x38] sm:$0xff]
    %v140 = vld [vmem:[#allocation5 + $0x40] sm:$0xff]
    %v141 = vld [vmem:[#allocation5 + $0x48] sm:$0xff]
    %v142 = vld [vmem:[#allocation5 + $0x50] sm:$0xff]
    %v143 = vld [vmem:[#allocation5 + $0x58] sm:$0xff]
    %v144 = vld [vmem:[#allocation5 + $0x60] sm:$0xff]
    %v145 = vld [vmem:[#allocation5 + $0x68] sm:$0xff]
    %v146 = vld [vmem:[#allocation5 + $0x70] sm:$0xff]
    %v147 = vld [vmem:[#allocation5 + $0x78] sm:$0xff]
    %v148 = vld [vmem:[#allocation5 + $0x80] sm:$0xff]
    %v149 = vld [vmem:[#allocation5 + $0x88] sm:$0xff]
    %v150 = vld [vmem:[#allocation5 + $0x90] sm:$0xff]
    %v151 = vld [vmem:[#allocation5 + $0x98] sm:$0xff]
    %v152 = vld [vmem:[#allocation5 + $0xa0] sm:$0xff]
    %v153 = vld [vmem:[#allocation5 + $0xa8] sm:$0xff]
    %v154 = vld [vmem:[#allocation5 + $0xb0] sm:$0xff]
    %v155 = vld [vmem:[#allocation5 + $0xb8] sm:$0xff]
    %v156 = vld [vmem:[#allocation5 + $0xc0] sm:$0xff]
    %v157 = vld [vmem:[#allocation5 + $0xc8] sm:$0xff]
    %v158 = vld [vmem:[#allocation5 + $0xd0] sm:$0xff]
    %v159 = vld [vmem:[#allocation5 + $0xd8] sm:$0xff]
    %v160 = vld [vmem:[#allocation5 + $0xe0] sm:$0xff]
    %v161 = vld [vmem:[#allocation5 + $0xe8] sm:$0xff]
    %v162 = vld [vmem:[#allocation5 + $0xf0] sm:$0xff]
    %v163 = vld [vmem:[#allocation5 + $0xf8] sm:$0xff]
    %v164 = vld [vmem:[#allocation5 + $0x100] sm:$0xff]
    %v165 = vld [vmem:[#allocation5 + $0x108] sm:$0xff]
    %v166 = vld [vmem:[#allocation5 + $0x110] sm:$0xff]
    %v167 = vld [vmem:[#allocation5 + $0x118] sm:$0xff]
    %v168 = vld [vmem:[#allocation5 + $0x120] sm:$0xff]
    %v169 = vld [vmem:[#allocation5 + $0x128] sm:$0xff]
    %v170 = vld [vmem:[#allocation5 + $0x130] sm:$0xff]
    %v171 = vld [vmem:[#allocation5 + $0x138] sm:$0xff]
    %v172 = vld [vmem:[#allocation5 + $0x140] sm:$0xff]
    %v173 = vld [vmem:[#allocation5 + $0x148] sm:$0xff]
    %v174 = vld [vmem:[#allocation5 + $0x150] sm:$0xff]
    %v175 = vld [vmem:[#allocation5 + $0x158] sm:$0xff]
    %v176 = vld [vmem:[#allocation5 + $0x160] sm:$0xff]
    %v177 = vld [vmem:[#allocation5 + $0x168] sm:$0xff]
    %v178 = vld [vmem:[#allocation5 + $0x170] sm:$0xff]
    %v179 = vld [vmem:[#allocation5 + $0x178] sm:$0xff]
    %v180 = vld [vmem:[#allocation5 + $0x180] sm:$0xff]
    %v181 = vld [vmem:[#allocation5 + $0x188] sm:$0xff]
    %v182 = vld [vmem:[#allocation5 + $0x190] sm:$0xff]
    %v183 = vld [vmem:[#allocation5 + $0x198] sm:$0xff]
    %v184 = vld [vmem:[#allocation5 + $0x1a0] sm:$0xff]
    %v185 = vld [vmem:[#allocation5 + $0x1a8] sm:$0xff]
    %v186 = vld [vmem:[#allocation5 + $0x1b0] sm:$0xff]
    %v187 = vld [vmem:[#allocation5 + $0x1b8] sm:$0xff]
    %v188 = vld [vmem:[#allocation5 + $0x1c0] sm:$0xff]
    %v189 = vld [vmem:[#allocation5 + $0x1c8] sm:$0xff]
    %v190 = vld [vmem:[#allocation5 + $0x1d0] sm:$0xff]
    %v191 = vld [vmem:[#allocation5 + $0x1d8] sm:$0xff]
    %v192 = vld [vmem:[#allocation5 + $0x1e0] sm:$0xff]
    %v193 = vld [vmem:[#allocation5 + $0x1e8] sm:$0xff]
    %v194 = vld [vmem:[#allocation5 + $0x1f0] sm:$0xff]
    %v195 = vld [vmem:[#allocation5 + $0x1f8] sm:$0xff]
    %v196 = vld [vmem:[#allocation5 + $0x200] sm:$0xff]
    %v197 = vld [vmem:[#allocation5 + $0x208] sm:$0xff]
    %v198 = vld [vmem:[#allocation5 + $0x210] sm:$0xff]
    %v199 = vld [vmem:[#allocation5 + $0x218] sm:$0xff]
    %v200 = vld [vmem:[#allocation5 + $0x220] sm:$0xff]
    %v201 = vld [vmem:[#allocation5 + $0x228] sm:$0xff]
    %v202 = vld [vmem:[#allocation5 + $0x230] sm:$0xff]
    %v203 = vld [vmem:[#allocation5 + $0x238] sm:$0xff]
    %v204 = vld [vmem:[#allocation5 + $0x240] sm:$0xff]
    %v205 = vld [vmem:[#allocation5 + $0x248] sm:$0xff]
    %v206 = vld [vmem:[#allocation5 + $0x250] sm:$0xff]
    %v207 = vld [vmem:[#allocation5 + $0x258] sm:$0xff]
    %v208 = vld [vmem:[#allocation5 + $0x260] sm:$0xff]
    %v209 = vld [vmem:[#allocation5 + $0x268] sm:$0xff]
    %v210 = vld [vmem:[#allocation5 + $0x270] sm:$0xff]
    %v211 = vld [vmem:[#allocation5 + $0x278] sm:$0xff]
    %v212 = vld [vmem:[#allocation5 + $0x280] sm:$0xff]
    %v213 = vld [vmem:[#allocation5 + $0x288] sm:$0xff]
    %v214 = vld [vmem:[#allocation5 + $0x290] sm:$0xff]
    %v215 = vld [vmem:[#allocation5 + $0x298] sm:$0xff]
    %v216 = vld [vmem:[#allocation5 + $0x2a0] sm:$0xff]
    %v217 = vld [vmem:[#allocation5 + $0x2a8] sm:$0xff]
    %v218 = vld [vmem:[#allocation5 + $0x2b0] sm:$0xff]
    %v219 = vld [vmem:[#allocation5 + $0x2b8] sm:$0xff]
    %v220 = vld [vmem:[#allocation5 + $0x2c0] sm:$0xff]
    %v221 = vld [vmem:[#allocation5 + $0x2c8] sm:$0xff]
    %v222 = vld [vmem:[#allocation5 + $0x2d0] sm:$0xff]
    %v223 = vld [vmem:[#allocation5 + $0x2d8] sm:$0xff]
    %v224 = vld [vmem:[#allocation5 + $0x2e0] sm:$0xff]
    %v225 = vld [vmem:[#allocation5 + $0x2e8] sm:$0xff]
    %v226 = vld [vmem:[#allocation5 + $0x2f0] sm:$0xff]
    %v227 = vld [vmem:[#allocation5 + $0x2f8] sm:$0xff]
    %v228 = vld [vmem:[#allocation7] sm:$0x3]
    %v230 = vperm.slane %v228, 0
    %v231 = vperm.slane %v228, 1
    %234 = vmatpush.msra.mxu0 %v162
    %235 = vmatpush.msra.mxu0 %v160
    %236 = vmatpush.msra.mxu0 %v158
    %237 = vmatpush.msra.mxu0 %v156
    %238 = vmatpush.msra.mxu0 %v154
    %239 = vmatpush.msra.mxu0 %v152
    %240 = vmatpush.msra.mxu0 %v150
    %241 = vmatpush.msra.mxu0 %v148
    %242 = vmatpush.msra.mxu0 %v146
    %243 = vmatpush.msra.mxu0 %v144
    %244 = vmatpush.msra.mxu0 %v142
    %245 = vmatpush.msra.mxu0 %v140
    %246 = vmatpush.msra.mxu0 %v138
    %247 = vmatpush.msra.mxu0 %v136
    %248 = vmatpush.msra.mxu0 %v134
    %249 = vmatpush.msra.mxu0 %v132
    %250 = vmatmul.f32.gmra.mxu0 %v60
    %v251 = vpop.f32.mrf.mxu0
    %v252 = vadd.f32 %v230, %v251
    %253 = vmatmul.f32.gmra.mxu0 %v63
    %v254 = vpop.f32.mrf.mxu0
    %v255 = vadd.f32 %v230, %v254
    %256 = vmatmul.f32.gmra.mxu0 %v66
    %v257 = vpop.f32.mrf.mxu0
    %v258 = vadd.f32 %v230, %v257
    %259 = vmatmul.f32.gmra.mxu0 %v69
    %v260 = vpop.f32.mrf.mxu0
    %v261 = vadd.f32 %v230, %v260
    %262 = vmatmul.f32.gmra.mxu0 %v72
    %v263 = vpop.f32.mrf.mxu0
    %v264 = vadd.f32 %v230, %v263
    %265 = vmatmul.f32.gmra.mxu0 %v75
    %v266 = vpop.f32.mrf.mxu0
    %v267 = vadd.f32 %v230, %v266
    %268 = vmatmul.f32.gmra.mxu0 %v78
    %v269 = vpop.f32.mrf.mxu0
    %v270 = vadd.f32 %v230, %v269
    %271 = vmatmul.f32.gmra.mxu0 %v81
    %v272 = vpop.f32.mrf.mxu0
    %v273 = vadd.f32 %v230, %v272
    %274 = vmatmul.f32.gmra.mxu0 %v84
    %v275 = vpop.f32.mrf.mxu0
    %v276 = vadd.f32 %v230, %v275
    %277 = vmatmul.f32.gmra.mxu0 %v87
    %v278 = vpop.f32.mrf.mxu0
    %v279 = vadd.f32 %v230, %v278
    %280 = vmatmul.f32.gmra.mxu0 %v90
    %v281 = vpop.f32.mrf.mxu0
    %v282 = vadd.f32 %v230, %v281
    %283 = vmatmul.f32.gmra.mxu0 %v93
    %v284 = vpop.f32.mrf.mxu0
    %v285 = vadd.f32 %v230, %v284
    %286 = vmatmul.f32.gmra.mxu0 %v96
    %v287 = vpop.f32.mrf.mxu0
    %v288 = vadd.f32 %v230, %v287
    %289 = vmatmul.f32.gmra.mxu0 %v99
    %v290 = vpop.f32.mrf.mxu0
    %v291 = vadd.f32 %v230, %v290
    %292 = vmatmul.f32.gmra.mxu0 %v102
    %v293 = vpop.f32.mrf.mxu0
    %v294 = vadd.f32 %v230, %v293
    %295 = vmatmul.f32.gmra.mxu0 %v105
    %v296 = vpop.f32.mrf.mxu0
    %v297 = vadd.f32 %v230, %v296
    %298 = vmatmul.f32.gmra.mxu0 %v108
    %v299 = vpop.f32.mrf.mxu0
    %v300 = vadd.f32 %v230, %v299
    %301 = vmatmul.f32.gmra.mxu0 %v111
    %v302 = vpop.f32.mrf.mxu0
    %v303 = vadd.f32 %v230, %v302
    %304 = vmatmul.f32.gmra.mxu0 %v114
    %v305 = vpop.f32.mrf.mxu0
    %v306 = vadd.f32 %v230, %v305
    %307 = vmatmul.f32.gmra.mxu0 %v117
    %v308 = vpop.f32.mrf.mxu0
    %v309 = vadd.f32 %v230, %v308
    %310 = vmatmul.f32.gmra.mxu0 %v120
    %v311 = vpop.f32.mrf.mxu0
    %v312 = vadd.f32 %v230, %v311
    %313 = vmatmul.f32.gmra.mxu0 %v123
    %v314 = vpop.f32.mrf.mxu0
    %v315 = vadd.f32 %v230, %v314
    %316 = vmatmul.f32.gmra.mxu0 %v126
    %v317 = vpop.f32.mrf.mxu0
    %v318 = vadd.f32 %v230, %v317
    %319 = vmatmul.f32.gmra.mxu0 %v129
    %v320 = vpop.f32.mrf.mxu0
    %v321 = vadd.f32 %v230, %v320
    %322 = vdwg.mxu0
    %323 = vmatpush.msra.mxu0 %v194
    %324 = vmatpush.msra.mxu0 %v192
    %325 = vmatpush.msra.mxu0 %v190
    %326 = vmatpush.msra.mxu0 %v188
    %327 = vmatpush.msra.mxu0 %v186
    %328 = vmatpush.msra.mxu0 %v184
    %329 = vmatpush.msra.mxu0 %v182
    %330 = vmatpush.msra.mxu0 %v180
    %331 = vmatpush.msra.mxu0 %v178
    %332 = vmatpush.msra.mxu0 %v176
    %333 = vmatpush.msra.mxu0 %v174
    %334 = vmatpush.msra.mxu0 %v172
    %335 = vmatpush.msra.mxu0 %v170
    %336 = vmatpush.msra.mxu0 %v168
    %337 = vmatpush.msra.mxu0 %v166
    %338 = vmatpush.msra.mxu0 %v164
    %339 = vmatmul.f32.gmra.mxu0 %v61
    %v340 = vpop.f32.mrf.mxu0
    %v341 = vadd.f32 %v252, %v340
    %342 = vmatmul.f32.gmra.mxu0 %v64
    %v343 = vpop.f32.mrf.mxu0
    %v344 = vadd.f32 %v255, %v343
    %345 = vmatmul.f32.gmra.mxu0 %v67
    %v346 = vpop.f32.mrf.mxu0
    %v347 = vadd.f32 %v258, %v346
    %348 = vmatmul.f32.gmra.mxu0 %v70
    %v349 = vpop.f32.mrf.mxu0
    %v350 = vadd.f32 %v261, %v349
    %351 = vmatmul.f32.gmra.mxu0 %v73
    %v352 = vpop.f32.mrf.mxu0
    %v353 = vadd.f32 %v264, %v352
    %354 = vmatmul.f32.gmra.mxu0 %v76
    %v355 = vpop.f32.mrf.mxu0
    %v356 = vadd.f32 %v267, %v355
    %357 = vmatmul.f32.gmra.mxu0 %v79
    %v358 = vpop.f32.mrf.mxu0
    %v359 = vadd.f32 %v270, %v358
    %360 = vmatmul.f32.gmra.mxu0 %v82
    %v361 = vpop.f32.mrf.mxu0
    %v362 = vadd.f32 %v273, %v361
    %363 = vmatmul.f32.gmra.mxu0 %v85
    %v364 = vpop.f32.mrf.mxu0
    %v365 = vadd.f32 %v276, %v364
    %366 = vmatmul.f32.gmra.mxu0 %v88
    %v367 = vpop.f32.mrf.mxu0
    %v368 = vadd.f32 %v279, %v367
    %369 = vmatmul.f32.gmra.mxu0 %v91
    %v370 = vpop.f32.mrf.mxu0
    %v371 = vadd.f32 %v282, %v370
    %372 = vmatmul.f32.gmra.mxu0 %v94
    %v373 = vpop.f32.mrf.mxu0
    %v374 = vadd.f32 %v285, %v373
    %375 = vmatmul.f32.gmra.mxu0 %v97
    %v376 = vpop.f32.mrf.mxu0
    %v377 = vadd.f32 %v288, %v376
    %378 = vmatmul.f32.gmra.mxu0 %v100
    %v379 = vpop.f32.mrf.mxu0
    %v380 = vadd.f32 %v291, %v379
    %381 = vmatmul.f32.gmra.mxu0 %v103
    %v382 = vpop.f32.mrf.mxu0
    %v383 = vadd.f32 %v294, %v382
    %384 = vmatmul.f32.gmra.mxu0 %v106
    %v385 = vpop.f32.mrf.mxu0
    %v386 = vadd.f32 %v297, %v385
    %387 = vmatmul.f32.gmra.mxu0 %v109
    %v388 = vpop.f32.mrf.mxu0
    %v389 = vadd.f32 %v300, %v388
    %390 = vmatmul.f32.gmra.mxu0 %v112
    %v391 = vpop.f32.mrf.mxu0
    %v392 = vadd.f32 %v303, %v391
    %393 = vmatmul.f32.gmra.mxu0 %v115
    %v394 = vpop.f32.mrf.mxu0
    %v395 = vadd.f32 %v306, %v394
    %396 = vmatmul.f32.gmra.mxu0 %v118
    %v397 = vpop.f32.mrf.mxu0
    %v398 = vadd.f32 %v309, %v397
    %399 = vmatmul.f32.gmra.mxu0 %v121
    %v400 = vpop.f32.mrf.mxu0
    %v401 = vadd.f32 %v312, %v400
    %402 = vmatmul.f32.gmra.mxu0 %v124
    %v403 = vpop.f32.mrf.mxu0
    %v404 = vadd.f32 %v315, %v403
    %405 = vmatmul.f32.gmra.mxu0 %v127
    %v406 = vpop.f32.mrf.mxu0
    %v407 = vadd.f32 %v318, %v406
    %408 = vmatmul.f32.gmra.mxu0 %v130
    %v409 = vpop.f32.mrf.mxu0
    %v410 = vadd.f32 %v321, %v409
    %411 = vdwg.mxu0
    %412 = vmatpush.msra.mxu0 %v226
    %413 = vmatpush.msra.mxu0 %v224
    %414 = vmatpush.msra.mxu0 %v222
    %415 = vmatpush.msra.mxu0 %v220
    %416 = vmatpush.msra.mxu0 %v218
    %417 = vmatpush.msra.mxu0 %v216
    %418 = vmatpush.msra.mxu0 %v214
    %419 = vmatpush.msra.mxu0 %v212
    %420 = vmatpush.msra.mxu0 %v210
    %421 = vmatpush.msra.mxu0 %v208
    %422 = vmatpush.msra.mxu0 %v206
    %423 = vmatpush.msra.mxu0 %v204
    %424 = vmatpush.msra.mxu0 %v202
    %425 = vmatpush.msra.mxu0 %v200
    %426 = vmatpush.msra.mxu0 %v198
    %427 = vmatpush.msra.mxu0 %v196
    %428 = vmatmul.f32.gmra.mxu0 %v62
    %v429 = vpop.f32.mrf.mxu0
    %v430 = vadd.f32 %v341, %v429
    %431 = vmatmul.f32.gmra.mxu0 %v65
    %v432 = vpop.f32.mrf.mxu0
    %v433 = vadd.f32 %v344, %v432
    %434 = vmatmul.f32.gmra.mxu0 %v68
    %v435 = vpop.f32.mrf.mxu0
    %v436 = vadd.f32 %v347, %v435
    %437 = vmatmul.f32.gmra.mxu0 %v71
    %v438 = vpop.f32.mrf.mxu0
    %v439 = vadd.f32 %v350, %v438
    %440 = vmatmul.f32.gmra.mxu0 %v74
    %v441 = vpop.f32.mrf.mxu0
    %v442 = vadd.f32 %v353, %v441
    %443 = vmatmul.f32.gmra.mxu0 %v77
    %v444 = vpop.f32.mrf.mxu0
    %v445 = vadd.f32 %v356, %v444
    %446 = vmatmul.f32.gmra.mxu0 %v80
    %v447 = vpop.f32.mrf.mxu0
    %v448 = vadd.f32 %v359, %v447
    %449 = vmatmul.f32.gmra.mxu0 %v83
    %v450 = vpop.f32.mrf.mxu0
    %v451 = vadd.f32 %v362, %v450
    %452 = vmatmul.f32.gmra.mxu0 %v86
    %v453 = vpop.f32.mrf.mxu0
    %v454 = vadd.f32 %v365, %v453
    %455 = vmatmul.f32.gmra.mxu0 %v89
    %v456 = vpop.f32.mrf.mxu0
    %v457 = vadd.f32 %v368, %v456
    %458 = vmatmul.f32.gmra.mxu0 %v92
    %v459 = vpop.f32.mrf.mxu0
    %v460 = vadd.f32 %v371, %v459
    %461 = vmatmul.f32.gmra.mxu0 %v95
    %v462 = vpop.f32.mrf.mxu0
    %v463 = vadd.f32 %v374, %v462
    %464 = vmatmul.f32.gmra.mxu0 %v98
    %v465 = vpop.f32.mrf.mxu0
    %v466 = vadd.f32 %v377, %v465
    %467 = vmatmul.f32.gmra.mxu0 %v101
    %v468 = vpop.f32.mrf.mxu0
    %v469 = vadd.f32 %v380, %v468
    %470 = vmatmul.f32.gmra.mxu0 %v104
    %v471 = vpop.f32.mrf.mxu0
    %v472 = vadd.f32 %v383, %v471
    %473 = vmatmul.f32.gmra.mxu0 %v107
    %v474 = vpop.f32.mrf.mxu0
    %v475 = vadd.f32 %v386, %v474
    %476 = vmatmul.f32.gmra.mxu0 %v110
    %v477 = vpop.f32.mrf.mxu0
    %v478 = vadd.f32 %v389, %v477
    %479 = vmatmul.f32.gmra.mxu0 %v113
    %v480 = vpop.f32.mrf.mxu0
    %v481 = vadd.f32 %v392, %v480
    %482 = vmatmul.f32.gmra.mxu0 %v116
    %v483 = vpop.f32.mrf.mxu0
    %v484 = vadd.f32 %v395, %v483
    %485 = vmatmul.f32.gmra.mxu0 %v119
    %v486 = vpop.f32.mrf.mxu0
    %v487 = vadd.f32 %v398, %v486
    %488 = vmatmul.f32.gmra.mxu0 %v122
    %v489 = vpop.f32.mrf.mxu0
    %v490 = vadd.f32 %v401, %v489
    %491 = vmatmul.f32.gmra.mxu0 %v125
    %v492 = vpop.f32.mrf.mxu0
    %v493 = vadd.f32 %v404, %v492
    %494 = vmatmul.f32.gmra.mxu0 %v128
    %v495 = vpop.f32.mrf.mxu0
    %v496 = vadd.f32 %v407, %v495
    %497 = vmatmul.f32.gmra.mxu0 %v131
    %v498 = vpop.f32.mrf.mxu0
    %v499 = vadd.f32 %v410, %v498
    %500 = vdwg.mxu0
    %501 = vmatpush.msra.mxu0 %v163
    %502 = vmatpush.msra.mxu0 %v161
    %503 = vmatpush.msra.mxu0 %v159
    %504 = vmatpush.msra.mxu0 %v157
    %505 = vmatpush.msra.mxu0 %v155
    %506 = vmatpush.msra.mxu0 %v153
    %507 = vmatpush.msra.mxu0 %v151
    %508 = vmatpush.msra.mxu0 %v149
    %509 = vmatpush.msra.mxu0 %v147
    %510 = vmatpush.msra.mxu0 %v145
    %511 = vmatpush.msra.mxu0 %v143
    %512 = vmatpush.msra.mxu0 %v141
    %513 = vmatpush.msra.mxu0 %v139
    %514 = vmatpush.msra.mxu0 %v137
    %515 = vmatpush.msra.mxu0 %v135
    %516 = vmatpush.msra.mxu0 %v133
    %517 = vmatmul.f32.gmra.mxu0 %v60
    %v518 = vpop.f32.mrf.mxu0
    %v519 = vadd.f32 %v231, %v518
    %520 = vmatmul.f32.gmra.mxu0 %v63
    %v521 = vpop.f32.mrf.mxu0
    %v522 = vadd.f32 %v231, %v521
    %523 = vmatmul.f32.gmra.mxu0 %v66
    %v524 = vpop.f32.mrf.mxu0
    %v525 = vadd.f32 %v231, %v524
    %526 = vmatmul.f32.gmra.mxu0 %v69
    %v527 = vpop.f32.mrf.mxu0
    %v528 = vadd.f32 %v231, %v527
    %529 = vmatmul.f32.gmra.mxu0 %v72
    %v530 = vpop.f32.mrf.mxu0
    %v531 = vadd.f32 %v231, %v530
    %532 = vmatmul.f32.gmra.mxu0 %v75
    %v533 = vpop.f32.mrf.mxu0
    %v534 = vadd.f32 %v231, %v533
    %535 = vmatmul.f32.gmra.mxu0 %v78
    %v536 = vpop.f32.mrf.mxu0
    %v537 = vadd.f32 %v231, %v536
    %538 = vmatmul.f32.gmra.mxu0 %v81
    %v539 = vpop.f32.mrf.mxu0
    %v540 = vadd.f32 %v231, %v539
    %541 = vmatmul.f32.gmra.mxu0 %v84
    %v542 = vpop.f32.mrf.mxu0
    %v543 = vadd.f32 %v231, %v542
    %544 = vmatmul.f32.gmra.mxu0 %v87
    %v545 = vpop.f32.mrf.mxu0
    %v546 = vadd.f32 %v231, %v545
    %547 = vmatmul.f32.gmra.mxu0 %v90
    %v548 = vpop.f32.mrf.mxu0
    %v549 = vadd.f32 %v231, %v548
    %550 = vmatmul.f32.gmra.mxu0 %v93
    %v551 = vpop.f32.mrf.mxu0
    %v552 = vadd.f32 %v231, %v551
    %553 = vmatmul.f32.gmra.mxu0 %v96
    %v554 = vpop.f32.mrf.mxu0
    %v555 = vadd.f32 %v231, %v554
    %556 = vmatmul.f32.gmra.mxu0 %v99
    %v557 = vpop.f32.mrf.mxu0
    %v558 = vadd.f32 %v231, %v557
    %559 = vmatmul.f32.gmra.mxu0 %v102
    %v560 = vpop.f32.mrf.mxu0
    %v561 = vadd.f32 %v231, %v560
    %562 = vmatmul.f32.gmra.mxu0 %v105
    %v563 = vpop.f32.mrf.mxu0
    %v564 = vadd.f32 %v231, %v563
    %565 = vmatmul.f32.gmra.mxu0 %v108
    %v566 = vpop.f32.mrf.mxu0
    %v567 = vadd.f32 %v231, %v566
    %568 = vmatmul.f32.gmra.mxu0 %v111
    %v569 = vpop.f32.mrf.mxu0
    %v570 = vadd.f32 %v231, %v569
    %571 = vmatmul.f32.gmra.mxu0 %v114
    %v572 = vpop.f32.mrf.mxu0
    %v573 = vadd.f32 %v231, %v572
    %574 = vmatmul.f32.gmra.mxu0 %v117
    %v575 = vpop.f32.mrf.mxu0
    %v576 = vadd.f32 %v231, %v575
    %577 = vmatmul.f32.gmra.mxu0 %v120
    %v578 = vpop.f32.mrf.mxu0
    %v579 = vadd.f32 %v231, %v578
    %580 = vmatmul.f32.gmra.mxu0 %v123
    %v581 = vpop.f32.mrf.mxu0
    %v582 = vadd.f32 %v231, %v581
    %583 = vmatmul.f32.gmra.mxu0 %v126
    %v584 = vpop.f32.mrf.mxu0
    %v585 = vadd.f32 %v231, %v584
    %586 = vmatmul.f32.gmra.mxu0 %v129
    %v587 = vpop.f32.mrf.mxu0
    %v588 = vadd.f32 %v231, %v587
    %589 = vdwg.mxu0
    %590 = vmatpush.msra.mxu0 %v195
    %591 = vmatpush.msra.mxu0 %v193
    %592 = vmatpush.msra.mxu0 %v191
    %593 = vmatpush.msra.mxu0 %v189
    %594 = vmatpush.msra.mxu0 %v187
    %595 = vmatpush.msra.mxu0 %v185
    %596 = vmatpush.msra.mxu0 %v183
    %597 = vmatpush.msra.mxu0 %v181
    %598 = vmatpush.msra.mxu0 %v179
    %599 = vmatpush.msra.mxu0 %v177
    %600 = vmatpush.msra.mxu0 %v175
    %601 = vmatpush.msra.mxu0 %v173
    %602 = vmatpush.msra.mxu0 %v171
    %603 = vmatpush.msra.mxu0 %v169
    %604 = vmatpush.msra.mxu0 %v167
    %605 = vmatpush.msra.mxu0 %v165
    %606 = vmatmul.f32.gmra.mxu0 %v61
    %v607 = vpop.f32.mrf.mxu0
    %v608 = vadd.f32 %v519, %v607
    %609 = vmatmul.f32.gmra.mxu0 %v64
    %v610 = vpop.f32.mrf.mxu0
    %v611 = vadd.f32 %v522, %v610
    %612 = vmatmul.f32.gmra.mxu0 %v67
    %v613 = vpop.f32.mrf.mxu0
    %v614 = vadd.f32 %v525, %v613
    %615 = vmatmul.f32.gmra.mxu0 %v70
    %v616 = vpop.f32.mrf.mxu0
    %v617 = vadd.f32 %v528, %v616
    %618 = vmatmul.f32.gmra.mxu0 %v73
    %v619 = vpop.f32.mrf.mxu0
    %v620 = vadd.f32 %v531, %v619
    %621 = vmatmul.f32.gmra.mxu0 %v76
    %v622 = vpop.f32.mrf.mxu0
    %v623 = vadd.f32 %v534, %v622
    %624 = vmatmul.f32.gmra.mxu0 %v79
    %v625 = vpop.f32.mrf.mxu0
    %v626 = vadd.f32 %v537, %v625
    %627 = vmatmul.f32.gmra.mxu0 %v82
    %v628 = vpop.f32.mrf.mxu0
    %v629 = vadd.f32 %v540, %v628
    %630 = vmatmul.f32.gmra.mxu0 %v85
    %v631 = vpop.f32.mrf.mxu0
    %v632 = vadd.f32 %v543, %v631
    %633 = vmatmul.f32.gmra.mxu0 %v88
    %v634 = vpop.f32.mrf.mxu0
    %v635 = vadd.f32 %v546, %v634
    %636 = vmatmul.f32.gmra.mxu0 %v91
    %v637 = vpop.f32.mrf.mxu0
    %v638 = vadd.f32 %v549, %v637
    %639 = vmatmul.f32.gmra.mxu0 %v94
    %v640 = vpop.f32.mrf.mxu0
    %v641 = vadd.f32 %v552, %v640
    %642 = vmatmul.f32.gmra.mxu0 %v97
    %v643 = vpop.f32.mrf.mxu0
    %v644 = vadd.f32 %v555, %v643
    %645 = vmatmul.f32.gmra.mxu0 %v100
    %v646 = vpop.f32.mrf.mxu0
    %v647 = vadd.f32 %v558, %v646
    %648 = vmatmul.f32.gmra.mxu0 %v103
    %v649 = vpop.f32.mrf.mxu0
    %v650 = vadd.f32 %v561, %v649
    %651 = vmatmul.f32.gmra.mxu0 %v106
    %v652 = vpop.f32.mrf.mxu0
    %v653 = vadd.f32 %v564, %v652
    %654 = vmatmul.f32.gmra.mxu0 %v109
    %v655 = vpop.f32.mrf.mxu0
    %v656 = vadd.f32 %v567, %v655
    %657 = vmatmul.f32.gmra.mxu0 %v112
    %v658 = vpop.f32.mrf.mxu0
    %v659 = vadd.f32 %v570, %v658
    %660 = vmatmul.f32.gmra.mxu0 %v115
    %v661 = vpop.f32.mrf.mxu0
    %v662 = vadd.f32 %v573, %v661
    %663 = vmatmul.f32.gmra.mxu0 %v118
    %v664 = vpop.f32.mrf.mxu0
    %v665 = vadd.f32 %v576, %v664
    %666 = vmatmul.f32.gmra.mxu0 %v121
    %v667 = vpop.f32.mrf.mxu0
    %v668 = vadd.f32 %v579, %v667
    %669 = vmatmul.f32.gmra.mxu0 %v124
    %v670 = vpop.f32.mrf.mxu0
    %v671 = vadd.f32 %v582, %v670
    %672 = vmatmul.f32.gmra.mxu0 %v127
    %v673 = vpop.f32.mrf.mxu0
    %v674 = vadd.f32 %v585, %v673
    %675 = vmatmul.f32.gmra.mxu0 %v130
    %v676 = vpop.f32.mrf.mxu0
    %v677 = vadd.f32 %v588, %v676
    %678 = vdwg.mxu0
    %679 = vmatpush.msra.mxu0 %v227
    %680 = vmatpush.msra.mxu0 %v225
    %681 = vmatpush.msra.mxu0 %v223
    %682 = vmatpush.msra.mxu0 %v221
    %683 = vmatpush.msra.mxu0 %v219
    %684 = vmatpush.msra.mxu0 %v217
    %685 = vmatpush.msra.mxu0 %v215
    %686 = vmatpush.msra.mxu0 %v213
    %687 = vmatpush.msra.mxu0 %v211
    %688 = vmatpush.msra.mxu0 %v209
    %689 = vmatpush.msra.mxu0 %v207
    %690 = vmatpush.msra.mxu0 %v205
    %691 = vmatpush.msra.mxu0 %v203
    %692 = vmatpush.msra.mxu0 %v201
    %693 = vmatpush.msra.mxu0 %v199
    %694 = vmatpush.msra.mxu0 %v197
    %695 = vmatmul.f32.gmra.mxu0 %v62
    %v696 = vpop.f32.mrf.mxu0
    %v697 = vadd.f32 %v608, %v696
    %698 = vmatmul.f32.gmra.mxu0 %v65
    %v699 = vpop.f32.mrf.mxu0
    %v700 = vadd.f32 %v611, %v699
    %701 = vmatmul.f32.gmra.mxu0 %v68
    %v702 = vpop.f32.mrf.mxu0
    %v703 = vadd.f32 %v614, %v702
    %704 = vmatmul.f32.gmra.mxu0 %v71
    %v705 = vpop.f32.mrf.mxu0
    %v706 = vadd.f32 %v617, %v705
    %707 = vmatmul.f32.gmra.mxu0 %v74
    %v708 = vpop.f32.mrf.mxu0
    %v709 = vadd.f32 %v620, %v708
    %710 = vmatmul.f32.gmra.mxu0 %v77
    %v711 = vpop.f32.mrf.mxu0
    %v712 = vadd.f32 %v623, %v711
    %713 = vmatmul.f32.gmra.mxu0 %v80
    %v714 = vpop.f32.mrf.mxu0
    %v715 = vadd.f32 %v626, %v714
    %716 = vmatmul.f32.gmra.mxu0 %v83
    %v717 = vpop.f32.mrf.mxu0
    %v718 = vadd.f32 %v629, %v717
    %719 = vmatmul.f32.gmra.mxu0 %v86
    %v720 = vpop.f32.mrf.mxu0
    %v721 = vadd.f32 %v632, %v720
    %722 = vmatmul.f32.gmra.mxu0 %v89
    %v723 = vpop.f32.mrf.mxu0
    %v724 = vadd.f32 %v635, %v723
    %725 = vmatmul.f32.gmra.mxu0 %v92
    %v726 = vpop.f32.mrf.mxu0
    %v727 = vadd.f32 %v638, %v726
    %728 = vmatmul.f32.gmra.mxu0 %v95
    %v729 = vpop.f32.mrf.mxu0
    %v730 = vadd.f32 %v641, %v729
    %731 = vmatmul.f32.gmra.mxu0 %v98
    %v732 = vpop.f32.mrf.mxu0
    %v733 = vadd.f32 %v644, %v732
    %734 = vmatmul.f32.gmra.mxu0 %v101
    %v735 = vpop.f32.mrf.mxu0
    %v736 = vadd.f32 %v647, %v735
    %737 = vmatmul.f32.gmra.mxu0 %v104
    %v738 = vpop.f32.mrf.mxu0
    %v739 = vadd.f32 %v650, %v738
    %740 = vmatmul.f32.gmra.mxu0 %v107
    %v741 = vpop.f32.mrf.mxu0
    %v742 = vadd.f32 %v653, %v741
    %743 = vmatmul.f32.gmra.mxu0 %v110
    %v744 = vpop.f32.mrf.mxu0
    %v745 = vadd.f32 %v656, %v744
    %746 = vmatmul.f32.gmra.mxu0 %v113
    %v747 = vpop.f32.mrf.mxu0
    %v748 = vadd.f32 %v659, %v747
    %749 = vmatmul.f32.gmra.mxu0 %v116
    %v750 = vpop.f32.mrf.mxu0
    %v751 = vadd.f32 %v662, %v750
    %752 = vmatmul.f32.gmra.mxu0 %v119
    %v753 = vpop.f32.mrf.mxu0
    %v754 = vadd.f32 %v665, %v753
    %755 = vmatmul.f32.gmra.mxu0 %v122
    %v756 = vpop.f32.mrf.mxu0
    %v757 = vadd.f32 %v668, %v756
    %758 = vmatmul.f32.gmra.mxu0 %v125
    %v759 = vpop.f32.mrf.mxu0
    %v760 = vadd.f32 %v671, %v759
    %761 = vmatmul.f32.gmra.mxu0 %v128
    %v762 = vpop.f32.mrf.mxu0
    %v763 = vadd.f32 %v674, %v762
    %764 = vmatmul.f32.gmra.mxu0 %v131
    %v765 = vpop.f32.mrf.mxu0
    %v766 = vadd.f32 %v677, %v765
    %767 = vdwg.mxu0
    %768 = vst [vmem:[#allocation8] sm:$0xff] %v430
    %769 = vst [vmem:[#allocation8 + $0x8] sm:$0xff] %v697
    %770 = vst [vmem:[#allocation8 + $0x10] sm:$0xff] %v433
    %771 = vst [vmem:[#allocation8 + $0x18] sm:$0xff] %v700
    %772 = vst [vmem:[#allocation8 + $0x20] sm:$0xff] %v436
    %773 = vst [vmem:[#allocation8 + $0x28] sm:$0xff] %v703
    %774 = vst [vmem:[#allocation8 + $0x30] sm:$0xff] %v439
    %775 = vst [vmem:[#allocation8 + $0x38] sm:$0xff] %v706
    %776 = vst [vmem:[#allocation8 + $0x40] sm:$0xff] %v442
    %777 = vst [vmem:[#allocation8 + $0x48] sm:$0xff] %v709
    %778 = vst [vmem:[#allocation8 + $0x50] sm:$0xff] %v445
    %779 = vst [vmem:[#allocation8 + $0x58] sm:$0xff] %v712
    %780 = vst [vmem:[#allocation8 + $0x60] sm:$0xff] %v448
    %781 = vst [vmem:[#allocation8 + $0x68] sm:$0xff] %v715
    %782 = vst [vmem:[#allocation8 + $0x70] sm:$0xff] %v451
    %783 = vst [vmem:[#allocation8 + $0x78] sm:$0xff] %v718
    %784 = vst [vmem:[#allocation8 + $0x80] sm:$0xff] %v454
    %785 = vst [vmem:[#allocation8 + $0x88] sm:$0xff] %v721
    %786 = vst [vmem:[#allocation8 + $0x90] sm:$0xff] %v457
    %787 = vst [vmem:[#allocation8 + $0x98] sm:$0xff] %v724
    %788 = vst [vmem:[#allocation8 + $0xa0] sm:$0xff] %v460
    %789 = vst [vmem:[#allocation8 + $0xa8] sm:$0xff] %v727
    %790 = vst [vmem:[#allocation8 + $0xb0] sm:$0xff] %v463
    %791 = vst [vmem:[#allocation8 + $0xb8] sm:$0xff] %v730
    %792 = vst [vmem:[#allocation8 + $0xc0] sm:$0xff] %v466
    %793 = vst [vmem:[#allocation8 + $0xc8] sm:$0xff] %v733
    %794 = vst [vmem:[#allocation8 + $0xd0] sm:$0xff] %v469
    %795 = vst [vmem:[#allocation8 + $0xd8] sm:$0xff] %v736
    %796 = vst [vmem:[#allocation8 + $0xe0] sm:$0xff] %v472
    %797 = vst [vmem:[#allocation8 + $0xe8] sm:$0xff] %v739
    %798 = vst [vmem:[#allocation8 + $0xf0] sm:$0xff] %v475
    %799 = vst [vmem:[#allocation8 + $0xf8] sm:$0xff] %v742
    %800 = vst [vmem:[#allocation8 + $0x100] sm:$0xff] %v478
    %801 = vst [vmem:[#allocation8 + $0x108] sm:$0xff] %v745
    %802 = vst [vmem:[#allocation8 + $0x110] sm:$0xff] %v481
    %803 = vst [vmem:[#allocation8 + $0x118] sm:$0xff] %v748
    %804 = vst [vmem:[#allocation8 + $0x120] sm:$0xff] %v484
    %805 = vst [vmem:[#allocation8 + $0x128] sm:$0xff] %v751
    %806 = vst [vmem:[#allocation8 + $0x130] sm:$0xff] %v487
    %807 = vst [vmem:[#allocation8 + $0x138] sm:$0xff] %v754
    %808 = vst [vmem:[#allocation8 + $0x140] sm:$0xff] %v490
    %809 = vst [vmem:[#allocation8 + $0x148] sm:$0xff] %v757
    %810 = vst [vmem:[#allocation8 + $0x150] sm:$0xff] %v493
    %811 = vst [vmem:[#allocation8 + $0x158] sm:$0xff] %v760
    %812 = vst [vmem:[#allocation8 + $0x160] sm:$0xff] %v496
    %813 = vst [vmem:[#allocation8 + $0x168] sm:$0xff] %v763
    %814 = vst [vmem:[#allocation8 + $0x170] sm:$0xff] %v499
    %815 = vst [vmem:[#allocation8 + $0x178] sm:$0xff] %v766
    // Predicated region
    $region26: #{tpu_custom_call.1} parent=1 // pred_check
      _
    $region27: #{tpu_custom_call.1} parent=1 // pred_check_branch
      %817 = sbr.rel (0) target = $region29
    $region28: #{tpu_custom_call.1} parent=1 // pred_region
      %819 = vsyncadd [#allocation4], 0
      %s820 = sshll.u32 [#allocation8], 4
      %s821 = int_to_ptr.vmem [resolvable:$true] %s820
      %s822 = sshll.u32 %s3, 4
      %s823 = int_to_ptr.hbm [resolvable:$true] %s822
      %828 = dma.vmem_to_hbm [thread:$0]  %s821, 6144, %s823, [#allocation4], 256, 256, 16
    $region29: #{tpu_custom_call.1} parent=1 // pred_fallthru
      _
    // Predicated region
    $region30: #{tpu_custom_call.1} parent=1 // pred_check
      _
    $region31: #{tpu_custom_call.1} parent=1 // pred_check_branch
      %830 = sbr.rel (0) target = $region33
    $region32: #{tpu_custom_call.1} parent=1 // pred_region
      %832 = dma.done [#allocation4], 6144
    $region33: #{tpu_custom_call.1} parent=1 // pred_fallthru
      _
    %833 = vsyncpa [#allocation3], 1
    %834 = vsyncpa [#allocation6], 1
    %835 = vsyncpa [#allocation4], 1

</llo_original>
